<compile_context>
chip_gen: v5e
topology: v5e:2x2
jax: 0.10.0
libtpu: 0.0.40
codegen_flags: <defaults>
</compile_context>

<pallas_src>
import jax
import jax.numpy as jnp
from jax.experimental import pallas as pl
from jax.experimental.pallas import tpu as pltpu


def _round_up(x, m):
    return ((x + m - 1) // m) * m


def linear_sigmoid_kernel(x_ref, w_ref, b_ref, o_ref, acc_ref):
    k = pl.program_id(2)

    @pl.when(k == 0)
    def _():
        acc_ref[...] = jnp.zeros_like(acc_ref)

    # [tm, tk] (bf16) @ [tk, tn] (bf16) -> f32 accumulate on the MXU.
    acc_ref[...] += jnp.dot(x_ref[...], w_ref[...],
                            preferred_element_type=jnp.float32)

    @pl.when(k == pl.num_programs(2) - 1)
    def _():
        z = acc_ref[...] + b_ref[...]          # f32 bias broadcast over batch rows
        # Exact sigmoid via a single EUP op: sigmoid(z) = 0.5 * tanh(z/2) + 0.5.
        # The extra mul/adds land on the (idle) VALU slot.
        o_ref[...] = (0.5 * jnp.tanh(0.5 * z) + 0.5).astype(o_ref.dtype)


def init_linear_sigmoid(w, b, *, compute_dtype=jnp.bfloat16,
                        tm_max=512, tn_max=512, tk_max=1024):
    """Prepare parameters once (transpose / pad / bf16 cast) and return apply(x).

    w: (N, K) torch-style weight (out_features, in_features), f32.
    b: (N,) bias, f32.
    apply(x): x (B, K) f32  ->  sigmoid(x @ w.T + b), (B, N) f32.
    """
    N, K = w.shape
    assert b.shape == (N,)

    # Lane-aligned (multiple-of-128) tiles for N and K. Zero K-padding is exact
    # for the matmul; padded N columns are sliced off after the kernel, and the
    # lane-dense padded output avoids masked partial stores.
    tn = min(tn_max, _round_up(N, 128))
    tk = min(tk_max, _round_up(K, 128))
    Np = _round_up(N, tn)
    Kp = _round_up(K, tk)

    # Hoisted out of the per-call hot path: one-time transpose + pad + cast.
    w_t = jnp.pad(jnp.transpose(w), ((0, Kp - K), (0, Np - N))).astype(compute_dtype)
    b_p = jnp.pad(b, (0, Np - N)).reshape(1, Np).astype(jnp.float32)

    @jax.jit
    def apply(x):
        B, Kx = x.shape
        assert Kx == K

        tm = min(tm_max, _round_up(B, 8))
        if tm >= 256:                       # feed the 256x256 MXU (v6e/v7x)
            tm = (tm // 256) * 256
        Mp = _round_up(B, tm)

        # Keep a "parallel" grid axis > 1 where possible so both v7x
        # TensorCores get work (a (1,1,K) grid serializes on one core).
        tn_call = tn
        if (Mp // tm == 1 and Np // tn_call == 1
                and Np >= 256 and (Np // 2) % 128 == 0):
            tn_call = Np // 2

        xp = jnp.pad(x, ((0, Mp - B), (0, Kp - K))).astype(compute_dtype)

        grid = (Mp // tm, Np // tn_call, Kp // tk)

        out = pl.pallas_call(
            linear_sigmoid_kernel,
            out_shape=jax.ShapeDtypeStruct((Mp, Np), jnp.float32),
            grid_spec=pltpu.PrefetchScalarGridSpec(
                num_scalar_prefetch=0,
                grid=grid,
                in_specs=[
                    pl.BlockSpec((tm, tk), lambda i, j, k: (i, k)),
                    pl.BlockSpec((tk, tn_call), lambda i, j, k: (k, j)),
                    pl.BlockSpec((1, tn_call), lambda i, j, k: (0, j)),
                ],
                out_specs=pl.BlockSpec((tm, tn_call), lambda i, j, k: (i, j)),
                scratch_shapes=[pltpu.VMEM((tm, tn_call), jnp.float32)],
            ),
            compiler_params=pltpu.CompilerParams(
                dimension_semantics=("parallel", "parallel", "arbitrary"),
                # ~7 MiB worst-case double-buffered footprint at max tiles;
                # 32 MiB fits every generation (v5e/v6e 128 MiB physical VMEM,
                # v7x 64 MiB physical / 32 MiB scoped default).
                vmem_limit_bytes=32 * 1024 * 1024,
            ),
        )(xp, w_t, b_p)

        return out[:B, :N]

    return apply


if __name__ == "__main__":
    # Small shapes consistent with the module: Linear(input_dim -> output_dim).
    batch, input_dim, output_dim = 8, 32, 16

    key = jax.random.PRNGKey(0)
    kx, kw, kb = jax.random.split(key, 3)

    x = jax.random.normal(kx, (batch, input_dim), dtype=jnp.float32)

    # Deterministic parameter init (mimics nn.Linear's uniform init bounds).
    bound = 1.0 / jnp.sqrt(jnp.float32(input_dim))
    w = jax.random.uniform(kw, (output_dim, input_dim), jnp.float32, -bound, bound)
    b = jax.random.uniform(kb, (output_dim,), jnp.float32, -bound, bound)

    apply_fn = init_linear_sigmoid(w, b)
    out = jax.block_until_ready(apply_fn(x))
    assert out.shape == (batch, output_dim)

    # Tight check against a reference that quantizes operands to bf16 exactly
    # like the kernel does (f32 accumulation in both cases).
    xq = x.astype(jnp.bfloat16).astype(jnp.float32)
    wq = w.astype(jnp.bfloat16).astype(jnp.float32)
    ref_bf16 = jax.nn.sigmoid(xq @ wq.T + b)
    assert jnp.allclose(out, ref_bf16, atol=1e-4, rtol=1e-4)

    # Loose sanity check against the exact f32 nn.Linear -> nn.Sigmoid forward.
    ref_f32 = jax.nn.sigmoid(x @ w.T + b)
    assert jnp.allclose(out, ref_f32, atol=2e-2, rtol=2e-2)

    print("KERNEL_OK")
</pallas_src>

<mosaic_0001>
module attributes {stable_mosaic.version = 11 : i64} {
  func.func @linear_sigmoid_kernel(%arg0: i32, %arg1: i32, %arg2: i32, %arg3: memref<8x128xbf16, #tpu.memory_space<vmem>>, %arg4: memref<128x128xbf16, #tpu.memory_space<vmem>>, %arg5: memref<1x128xf32, #tpu.memory_space<vmem>>, %arg6: memref<8x128xf32, #tpu.memory_space<vmem>>, %arg7: memref<8x128xf32, #tpu.memory_space<vmem>>) attributes {dimension_semantics = [#tpu.dimension_semantics<parallel>, #tpu.dimension_semantics<parallel>, #tpu.dimension_semantics<arbitrary>], iteration_bounds = array<i64: 1, 1, 1>, scalar_prefetch = 0 : i64, scratch_operands = 1 : i64, tpu.core_type = #tpu.core_type<tc>, window_params = [{transform_indices = @transform_0, window_bounds = array<i64: 8, 128>}, {transform_indices = @transform_1, window_bounds = array<i64: 128, 128>}, {transform_indices = @transform_2, window_bounds = array<i64: 1, 128>}, {transform_indices = @transform_3, window_bounds = array<i64: 8, 128>}]} {
    %c0_i32 = arith.constant 0 : i32
    %0 = arith.cmpi eq, %arg2, %c0_i32 : i32
    %1 = arith.extui %0 : i1 to i32
    %c0_i32_0 = arith.constant 0 : i32
    %2 = arith.cmpi ne, %1, %c0_i32_0 : i32
    scf.if %2 {
      %cst_10 = arith.constant 0.000000e+00 : f32
      %12 = vector.broadcast %cst_10 : f32 to vector<8x128xf32>
      %c0_11 = arith.constant 0 : index
      %c0_12 = arith.constant 0 : index
      %13 = vector.load %arg7[%c0_11, %c0_12] : memref<8x128xf32, #tpu.memory_space<vmem>>, vector<8x128xf32>
      tpu.vector_store %arg7[%c0_11, %c0_12], %12 {strides = array<i32>} : memref<8x128xf32, #tpu.memory_space<vmem>>, vector<8x128xf32>,
    } else {
    }
    %c0 = arith.constant 0 : index
    %c0_1 = arith.constant 0 : index
    %3 = vector.load %arg7[%c0, %c0_1] : memref<8x128xf32, #tpu.memory_space<vmem>>, vector<8x128xf32>
    %c0_2 = arith.constant 0 : index
    %c0_3 = arith.constant 0 : index
    %4 = vector.load %arg3[%c0_2, %c0_3] : memref<8x128xbf16, #tpu.memory_space<vmem>>, vector<8x128xbf16>
    %c0_4 = arith.constant 0 : index
    %c0_5 = arith.constant 0 : index
    %5 = vector.load %arg4[%c0_4, %c0_5] : memref<128x128xbf16, #tpu.memory_space<vmem>>, vector<128x128xbf16>
    %cst = arith.constant dense<0.000000e+00> : vector<8x128xf32>
    %6 = tpu.matmul %4, %5, %cst {dimension_numbers = #tpu.dot_dimension_numbers<[1], [0], [0], [1], [0, 0, 1, 1], [], []>} : vector<8x128xbf16>, vector<128x128xbf16>, vector<8x128xf32> -> vector<8x128xf32>
    %7 = arith.addf %3, %6 : vector<8x128xf32>
    %c0_6 = arith.constant 0 : index
    %c0_7 = arith.constant 0 : index
    %8 = vector.load %arg7[%c0_6, %c0_7] : memref<8x128xf32, #tpu.memory_space<vmem>>, vector<8x128xf32>
    tpu.vector_store %arg7[%c0_6, %c0_7], %7 {strides = array<i32>} : memref<8x128xf32, #tpu.memory_space<vmem>>, vector<8x128xf32>,
    %c0_i32_8 = arith.constant 0 : i32
    %9 = arith.cmpi eq, %arg2, %c0_i32_8 : i32
    %10 = arith.extui %9 : i1 to i32
    %c0_i32_9 = arith.constant 0 : i32
    %11 = arith.cmpi ne, %10, %c0_i32_9 : i32
    scf.if %11 {
      %c0_10 = arith.constant 0 : index
      %c0_11 = arith.constant 0 : index
      %12 = vector.load %arg7[%c0_10, %c0_11] : memref<8x128xf32, #tpu.memory_space<vmem>>, vector<8x128xf32>
      %c0_12 = arith.constant 0 : index
      %c0_13 = arith.constant 0 : index
      %13 = vector.load %arg5[%c0_12, %c0_13] : memref<1x128xf32, #tpu.memory_space<vmem>>, vector<1x128xf32>
      %14 = vector.broadcast %13 : vector<1x128xf32> to vector<8x128xf32>
      %15 = arith.addf %12, %14 : vector<8x128xf32>
      %cst_14 = arith.constant 5.000000e-01 : f32
      %16 = vector.broadcast %cst_14 : f32 to vector<8x128xf32>
      %17 = arith.mulf %16, %15 : vector<8x128xf32>
      %18 = math.tanh %17 : vector<8x128xf32>
      %cst_15 = arith.constant 5.000000e-01 : f32
      %19 = vector.broadcast %cst_15 : f32 to vector<8x128xf32>
      %20 = arith.mulf %19, %18 : vector<8x128xf32>
      %cst_16 = arith.constant 5.000000e-01 : f32
      %21 = vector.broadcast %cst_16 : f32 to vector<8x128xf32>
      %22 = arith.addf %20, %21 : vector<8x128xf32>
      %c0_17 = arith.constant 0 : index
      %c0_18 = arith.constant 0 : index
      %23 = vector.load %arg6[%c0_17, %c0_18] : memref<8x128xf32, #tpu.memory_space<vmem>>, vector<8x128xf32>
      tpu.vector_store %arg6[%c0_17, %c0_18], %22 {strides = array<i32>} : memref<8x128xf32, #tpu.memory_space<vmem>>, vector<8x128xf32>,
    } else {
    }
    return
  }
  func.func @transform_0(%arg0: i32, %arg1: i32, %arg2: i32) -> (i32, i32) {
    %c0_i32 = arith.constant 0 : i32
    return %arg0, %arg2 : i32, i32
  }
  func.func @transform_1(%arg0: i32, %arg1: i32, %arg2: i32) -> (i32, i32) {
    %c0_i32 = arith.constant 0 : i32
    return %arg2, %arg1 : i32, i32
  }
  func.func @transform_2(%arg0: i32, %arg1: i32, %arg2: i32) -> (i32, i32) {
    %c0_i32 = arith.constant 0 : i32
    %c0_i32_0 = arith.constant 0 : i32
    return %c0_i32, %arg1 : i32, i32
  }
  func.func @transform_3(%arg0: i32, %arg1: i32, %arg2: i32) -> (i32, i32) {
    %c0_i32 = arith.constant 0 : i32
    return %arg0, %arg1 : i32, i32
  }
}

</mosaic_0001>

<llo_original>
// kernel: apply.1
$region0: #{apply.1}
  #allocation0 [shape = 'u32[]', space=smem, size = 0x4, offset = 0x4, fixed_abs, tag = 'smem constant byte address 0x4 - core index']
  #allocation1 [shape = 'u32[72,128]{1,0:T(1,128)}', space=vmem, size = 0x9000, scoped, tag = 'internal scratch']
  #allocation2 [shape = 'f32[8,128]{1,0:T(8,128)}', space=vmem, size = 0x1000, scoped, tag = 'scratch operand']
  %s0 = inlined_call_operand.vmem [shape: bf16[8,128], index: 0, kind: input, shape index: {}]
  %s1 = inlined_call_operand.hbm [shape: bf16[128,128], index: 1, kind: input, shape index: {}]
  %s2 = inlined_call_operand.vmem [shape: f32[1,128], index: 2, kind: input, shape index: {}]
  %s3 = inlined_call_operand.hbm [shape: f32[8,128], index: 3, kind: output, shape index: {}]
  %s4 = sld [smem:[#allocation0]]
  $region34: #{apply.1} parent=0
    _
  %s6 = ssub.s32 1, %s4
  %s7 = scalar_select 0, %s6, %s4
  $region1: #{apply.1} parent=0
    #allocation3 [shape = 'u8[32768]{0}', space=vmem, size = 0x8000, scoped, tag = 'input window, operand 1, single buffered']
    #allocation4 [shape = 's32[1]{0}', space=sflag, size = 0x4, scoped, tag = 'scoped memory for apply.1']
    #allocation5 [shape = 's32[1]{0}', space=sflag, size = 0x4, scoped, tag = 'scoped memory for apply.1']
    #allocation6 [shape = 'u8[4096]{0}', space=vmem, size = 0x1000, scoped, tag = 'output window, operand 0, single buffered']
    %8 = vsyncpa [#allocation4], 0
    %9 = vsyncpa [#allocation5], 0
    // Predicated region
    $region2: #{apply.1} parent=1 // pred_check
      _
    $region3: #{apply.1} parent=1 // pred_check_branch
      %11 = sbr.rel (0) target = $region5
    $region4: #{apply.1} parent=1 // pred_region
      _
    $region5: #{apply.1} parent=1 // pred_fallthru
      _
    // Predicated region
    $region6: #{apply.1} parent=1 // pred_check
      _
    $region7: #{apply.1} parent=1 // pred_check_branch
      %13 = sbr.rel (0) target = $region9
    $region8: #{apply.1} parent=1 // pred_region
      %15 = vsyncadd [#allocation4], 0
      %s16 = sshll.u32 %s1, 4
      %s17 = int_to_ptr.hbm [resolvable:$true] %s16
      %s18 = sshll.u32 [#allocation3], 4
      %s19 = int_to_ptr.vmem [resolvable:$true] %s18
      %24 = dma.hbm_to_vmem [thread:$0]  %s17, 1024, %s19, [#allocation4], 64, 64, 4
    $region9: #{apply.1} parent=1 // pred_fallthru
      _
    // Predicated region
    $region10: #{apply.1} parent=1 // pred_check
      _
    $region11: #{apply.1} parent=1 // pred_check_branch
      %26 = sbr.rel (0) target = $region13
    $region12: #{apply.1} parent=1 // pred_region
      _
    $region13: #{apply.1} parent=1 // pred_fallthru
      _
    // Predicated region
    $region14: #{apply.1} parent=1 // pred_check
      _
    $region15: #{apply.1} parent=1 // pred_check_branch
      %28 = sbr.rel (0) target = $region17
    $region16: #{apply.1} parent=1 // pred_region
      %30 = dma.done [#allocation4], 1024
    $region17: #{apply.1} parent=1 // pred_fallthru
      _
    %p31 = scmp.eq.s32.totalorder 0, 0
    // Predicated region
    $region18: #{apply.1} parent=1 // pred_check
      %p32 = pneg %p31
    $region19: #{apply.1} parent=1 // pred_check_branch
      %34 = sbr.rel (%p32) target = $region21
    $region20: #{apply.1} parent=1 // pred_region
      %35 = vst [vmem:[#allocation2] sm:$0xff] 0.0
    $region21: #{apply.1} parent=1 // pred_fallthru
      _
    %v36 = vld [vmem:[#allocation2] sm:$0xff]
    %v37 = vld [vmem:[%s0] sm:$0xf]
    %v38 = vld [vmem:[#allocation3] sm:$0xf]
    %v39 = vld [vmem:[#allocation3 + $0x4] sm:$0xf]
    %v40 = vld [vmem:[#allocation3 + $0x8] sm:$0xf]
    %v41 = vld [vmem:[#allocation3 + $0xc] sm:$0xf]
    %v42 = vld [vmem:[#allocation3 + $0x10] sm:$0xf]
    %v43 = vld [vmem:[#allocation3 + $0x14] sm:$0xf]
    %v44 = vld [vmem:[#allocation3 + $0x18] sm:$0xf]
    %v45 = vld [vmem:[#allocation3 + $0x1c] sm:$0xf]
    %v46 = vld [vmem:[#allocation3 + $0x20] sm:$0xf]
    %v47 = vld [vmem:[#allocation3 + $0x24] sm:$0xf]
    %v48 = vld [vmem:[#allocation3 + $0x28] sm:$0xf]
    %v49 = vld [vmem:[#allocation3 + $0x2c] sm:$0xf]
    %v50 = vld [vmem:[#allocation3 + $0x30] sm:$0xf]
    %v51 = vld [vmem:[#allocation3 + $0x34] sm:$0xf]
    %v52 = vld [vmem:[#allocation3 + $0x38] sm:$0xf]
    %v53 = vld [vmem:[#allocation3 + $0x3c] sm:$0xf]
    %v70 = vunpack.c.l.b16 %v38
    %v71 = vunpack.c.l.b16 %v39
    %v72 = vunpack.c.l.b16 %v40
    %v73 = vunpack.c.l.b16 %v41
    %v74 = vunpack.c.l.b16 %v42
    %v75 = vunpack.c.l.b16 %v43
    %v76 = vunpack.c.l.b16 %v44
    %v77 = vunpack.c.l.b16 %v45
    %v78 = vunpack.c.l.b16 %v46
    %v79 = vunpack.c.l.b16 %v47
    %v80 = vunpack.c.l.b16 %v48
    %v81 = vunpack.c.l.b16 %v49
    %v82 = vunpack.c.l.b16 %v50
    %v83 = vunpack.c.l.b16 %v51
    %v84 = vunpack.c.l.b16 %v52
    %v85 = vunpack.c.l.b16 %v53
    %v86 = vpack.c.b16 %v71, %v70
    %v87 = vpack.c.b16 %v73, %v72
    %v88 = vpack.c.b16 %v75, %v74
    %v89 = vpack.c.b16 %v77, %v76
    %v90 = vpack.c.b16 %v79, %v78
    %v91 = vpack.c.b16 %v81, %v80
    %v92 = vpack.c.b16 %v83, %v82
    %v93 = vpack.c.b16 %v85, %v84
    %102 = vmatpush.bf16.msra.mxu0 %v93
    %103 = vmatpush.bf16.msra.mxu0 %v92
    %104 = vmatpush.bf16.msra.mxu0 %v91
    %105 = vmatpush.bf16.msra.mxu0 %v90
    %106 = vmatpush.bf16.msra.mxu0 %v89
    %107 = vmatpush.bf16.msra.mxu0 %v88
    %108 = vmatpush.bf16.msra.mxu0 %v87
    %109 = vmatpush.bf16.msra.mxu0 %v86
    %110 = vmatmul.bf16.gmra.mxu0 %v37
    %v111 = vpop.f32.mrf.mxu0
    %v112 = vadd.f32 0.0, %v111
    %v113 = vpop.f32.mrf.mxu0
    %114 = vdwg.mxu0
    %v115 = vadd.f32 %v36, %v112
    %116 = vst [vmem:[#allocation2] sm:$0xff] %v115
    // Predicated region
    $region22: #{apply.1} parent=1 // pred_check
      %p117 = pneg %p31
    $region23: #{apply.1} parent=1 // pred_check_branch
      %119 = sbr.rel (%p117) target = $region25
    $region24: #{apply.1} parent=1 // pred_region
      %v120 = vld [vmem:[#allocation2] sm:$0xff]
      %v121 = vld [vmem:[%s2] sm:$0x1]
      %v123 = vperm.slane %v121, 0
      %v125 = vadd.f32 %v120, %v123
      %v126 = vmul.f32 %v125, 0.5
      %v127 = vtanh.pop %v126
      %v128 = vmul.f32 %v127, 0.5
      %v129 = vadd.f32 %v128, 0.5
      %130 = vst [vmem:[#allocation6] sm:$0xff] %v129
    $region25: #{apply.1} parent=1 // pred_fallthru
      _
    // Predicated region
    $region26: #{apply.1} parent=1 // pred_check
      _
    $region27: #{apply.1} parent=1 // pred_check_branch
      %132 = sbr.rel (0) target = $region29
    $region28: #{apply.1} parent=1 // pred_region
      %134 = vsyncadd [#allocation5], 0
      %s136 = sshll.u32 [#allocation6], 4
      %s137 = int_to_ptr.vmem [resolvable:$true] %s136
      %s138 = sshll.u32 %s3, 4
      %s139 = int_to_ptr.hbm [resolvable:$true] %s138
      %141 = dma.vmem_to_hbm [thread:$0]  %s137, 128, %s139, [#allocation5]
    $region29: #{apply.1} parent=1 // pred_fallthru
      _
    // Predicated region
    $region30: #{apply.1} parent=1 // pred_check
      _
    $region31: #{apply.1} parent=1 // pred_check_branch
      %143 = sbr.rel (0) target = $region33
    $region32: #{apply.1} parent=1 // pred_region
      %145 = dma.done [#allocation5], 128
    $region33: #{apply.1} parent=1 // pred_fallthru
      _
    %146 = vsyncpa [#allocation4], 1
    %147 = vsyncpa [#allocation5], 1

</llo_original>
